<compile_context>
chip_gen: v6e
topology: v6e:2x2x1
jax: 0.10.0
libtpu: 0.0.40
codegen_flags: <defaults>
</compile_context>

<pallas_src>
import jax
import jax.numpy as jnp
from jax.experimental import pallas as pl
from jax.experimental.pallas import tpu as pltpu


def _round_up(n, m):
    return pl.cdiv(n, m) * m


# --------------------------------------------------------------------------- #
# Kernel
# --------------------------------------------------------------------------- #
def _head_kernel(x_ref, w1_ref, b1_ref, w2_ref, b2_ref, o_ref):
    # x: [TB, D_in] native dtype -> cast to MXU dtype in-kernel.
    x = x_ref[...].astype(w1_ref.dtype)
    h = jnp.dot(x, w1_ref[...], preferred_element_type=jnp.float32)
    h = jnp.tanh(h + b1_ref[...])                      # bias add + tanh in f32
    out = jnp.dot(h.astype(w2_ref.dtype), w2_ref[...],
                  preferred_element_type=jnp.float32) + b2_ref[...]
    o_ref[...] = out.astype(o_ref.dtype)


# --------------------------------------------------------------------------- #
# One-time (init-time) parameter preparation
# --------------------------------------------------------------------------- #
def prepare_bart_head_params(w1, b1, w2, b2, *, mxu_dtype=jnp.bfloat16):
    """Pad classifier width to a multiple of 128 (lane-dense stores), cast
    weights to the MXU dtype and reshape biases to 2-D f32.  Do this ONCE at
    model init; per-call forward only streams x.

    w1: [D_in, D_inner]  b1: [D_inner]  w2: [D_inner, C]  b2: [C]
    (weights are stored pre-transposed vs. PyTorch's [out, in] nn.Linear layout)
    """
    D_in, D_inner = w1.shape
    C = w2.shape[1]
    C_pad = int(_round_up(max(C, 128), 128))
    if C_pad != C:
        w2 = jnp.pad(w2, ((0, 0), (0, C_pad - C)))
        b2 = jnp.pad(b2, (0, C_pad - C))
    params = dict(
        w1=w1.astype(mxu_dtype),
        b1=b1.reshape(1, D_inner).astype(jnp.float32),
        w2=w2.astype(mxu_dtype),
        b2=b2.reshape(1, C_pad).astype(jnp.float32),
    )
    return params, C


# --------------------------------------------------------------------------- #
# Tiling / VMEM heuristics
# --------------------------------------------------------------------------- #
def _pick_batch_tile(B, block_b):
    if B <= 256:
        # Single full-batch block (always layout-legal: equals the full dim).
        return int(B)
    # >= 2 grid steps so ("parallel",) can shard the batch axis across the two
    # TensorCores on v7x; 256-row granularity keeps tiles MXU/sublane friendly.
    half = int(_round_up(pl.cdiv(B, 2), 256))
    return int(min(_round_up(max(block_b, 256), 256), half))


def _vmem_limit_bytes(TB, D_in, D_inner, C_pad, x_dtype, w_dtype, out_dtype):
    xb = jnp.dtype(x_dtype).itemsize
    wb = jnp.dtype(w_dtype).itemsize
    ob = jnp.dtype(out_dtype).itemsize
    need = (
        2 * TB * D_in * xb            # streamed x tiles (double-buffered)
        + 2 * TB * C_pad * ob         # streamed out tiles (double-buffered)
        + 2 * D_in * D_inner * wb     # resident w1 (Pallas still allocates 2 bufs)
        + 2 * D_inner * C_pad * wb    # resident w2 (padded)
        + 2 * (D_inner + C_pad) * 4   # biases (f32)
        + TB * D_in * wb              # in-kernel x cast to MXU dtype
        + TB * D_inner * 4            # f32 intermediate h
        + TB * D_inner * wb           # h cast to MXU dtype
        + TB * C_pad * 4              # f32 output before final cast
    )
    try:
        cap = int(0.75 * pltpu.get_tpu_info().vmem_capacity_bytes)
    except Exception:  # pragma: no cover - conservative fallback
        cap = 64 * 1024 * 1024
    # 25% headroom for Mosaic internal scratch; never ask below 32 MiB.
    want = max(int(need * 1.25) + (4 << 20), 32 << 20)
    return int(min(cap, want))


# --------------------------------------------------------------------------- #
# Forward (per-call): only x-dependent work happens here
# --------------------------------------------------------------------------- #
def bart_classification_head_apply(x, params, num_classes, *, block_b=1024):
    """x: [B, D_in] -> logits [B, num_classes] (eval-mode forward)."""
    B, D_in = x.shape
    w1, b1, w2, b2 = params["w1"], params["b1"], params["w2"], params["b2"]
    D_inner = w1.shape[1]
    C_pad = w2.shape[1]
    out_dtype = x.dtype

    TB = _pick_batch_tile(B, block_b)
    grid = (int(pl.cdiv(B, TB)),)     # ragged last block is fine (rows discarded)

    vmem_limit = _vmem_limit_bytes(TB, D_in, D_inner, C_pad,
                                   x.dtype, w1.dtype, out_dtype)

    out = pl.pallas_call(
        _head_kernel,
        out_shape=jax.ShapeDtypeStruct((B, C_pad), out_dtype),
        grid=grid,
        in_specs=[
            pl.BlockSpec((TB, D_in), lambda i: (i, 0)),        # streamed x tile
            pl.BlockSpec((D_in, D_inner), lambda i: (0, 0)),   # resident w1
            pl.BlockSpec((1, D_inner), lambda i: (0, 0)),      # resident b1
            pl.BlockSpec((D_inner, C_pad), lambda i: (0, 0)),  # resident w2
            pl.BlockSpec((1, C_pad), lambda i: (0, 0)),        # resident b2
        ],
        out_specs=pl.BlockSpec((TB, C_pad), lambda i: (i, 0)),
        compiler_params=pltpu.CompilerParams(
            dimension_semantics=("parallel",),
            vmem_limit_bytes=vmem_limit,
        ),
    )(x, w1, b1, w2, b2)

    return out[:, :num_classes]


def bart_classification_head(x, w1, b1, w2, b2, *,
                             block_b=1024, mxu_dtype=jnp.bfloat16):
    """Convenience wrapper: prep params then apply.  In a real model call
    prepare_bart_head_params() once at init and reuse `params`."""
    params, C = prepare_bart_head_params(w1, b1, w2, b2, mxu_dtype=mxu_dtype)
    return bart_classification_head_apply(x, params, C, block_b=block_b)


# --------------------------------------------------------------------------- #
# Reference + demo
# --------------------------------------------------------------------------- #
def _reference(x, w1, b1, w2, b2):
    h = jnp.tanh(x @ w1 + b1)
    return h @ w2 + b2


if __name__ == "__main__":
    # Small demo shapes consistent with the module's forward (pooled hidden
    # states [batch, input_dim]).  These shapes are launch-overhead dominated;
    # the tiling / bf16 / lane-dense choices above pay off at production BART
    # shapes (D_in = D_inner = 768/1024, large B).
    B, input_dim, inner_dim, num_classes = 8, 32, 64, 8

    key = jax.random.PRNGKey(0)
    kx, kw1, kb1, kw2, kb2 = jax.random.split(key, 5)

    x = jax.random.normal(kx, (B, input_dim), dtype=jnp.float32)

    # Deterministic parameter init (nn.Linear-like uniform ranges),
    # stored pre-transposed: [in, out].
    lim1 = 1.0 / (input_dim ** 0.5)
    lim2 = 1.0 / (inner_dim ** 0.5)
    w1 = jax.random.uniform(kw1, (input_dim, inner_dim), jnp.float32, -lim1, lim1)
    b1 = jax.random.uniform(kb1, (inner_dim,), jnp.float32, -lim1, lim1)
    w2 = jax.random.uniform(kw2, (inner_dim, num_classes), jnp.float32, -lim2, lim2)
    b2 = jax.random.uniform(kb2, (num_classes,), jnp.float32, -lim2, lim2)

    ref = _reference(x, w1, b1, w2, b2)

    # Exact-f32 path: tight tolerance.
    params_f32, C = prepare_bart_head_params(w1, b1, w2, b2, mxu_dtype=jnp.float32)
    out_f32 = bart_classification_head_apply(x, params_f32, C)
    out_f32 = jax.block_until_ready(out_f32)
    assert out_f32.shape == (B, num_classes)
    assert jnp.allclose(out_f32, ref, atol=1e-5, rtol=1e-5)

    # Default bf16-MXU path (v6e/v7x optimized): relaxed tolerance.
    out_bf16 = bart_classification_head(x, w1, b1, w2, b2)
    out_bf16 = jax.block_until_ready(out_bf16)
    assert out_bf16.shape == (B, num_classes)
    assert jnp.allclose(out_bf16, ref, atol=5e-2, rtol=5e-2)

    print("KERNEL_OK")
</pallas_src>

<mosaic_0001>
module attributes {stable_mosaic.version = 11 : i64} {
  func.func @_head_kernel(%arg0: i32, %arg1: memref<8x32xf32, #tpu.memory_space<vmem>>, %arg2: memref<32x64xf32, #tpu.memory_space<vmem>>, %arg3: memref<1x64xf32, #tpu.memory_space<vmem>>, %arg4: memref<64x128xf32, #tpu.memory_space<vmem>>, %arg5: memref<1x128xf32, #tpu.memory_space<vmem>>, %arg6: memref<8x128xf32, #tpu.memory_space<vmem>>) attributes {dimension_semantics = [#tpu.dimension_semantics<parallel>], iteration_bounds = array<i64: 1>, scalar_prefetch = 0 : i64, scratch_operands = 0 : i64, tpu.core_type = #tpu.core_type<tc>, window_params = [{transform_indices = @transform_0, window_bounds = array<i64: 8, 32>}, {pipeline_mode = #tpu.pipeline_mode<synchronous>, transform_indices = @transform_1, window_bounds = array<i64: 32, 64>}, {pipeline_mode = #tpu.pipeline_mode<synchronous>, transform_indices = @transform_2, window_bounds = array<i64: 1, 64>}, {pipeline_mode = #tpu.pipeline_mode<synchronous>, transform_indices = @transform_3, window_bounds = array<i64: 64, 128>}, {pipeline_mode = #tpu.pipeline_mode<synchronous>, transform_indices = @transform_4, window_bounds = array<i64: 1, 128>}, {transform_indices = @transform_5, window_bounds = array<i64: 8, 128>}]} {
    %c0 = arith.constant 0 : index
    %c0_0 = arith.constant 0 : index
    %0 = vector.load %arg1[%c0, %c0_0] : memref<8x32xf32, #tpu.memory_space<vmem>>, vector<8x32xf32>
    %c0_1 = arith.constant 0 : index
    %c0_2 = arith.constant 0 : index
    %1 = vector.load %arg2[%c0_1, %c0_2] : memref<32x64xf32, #tpu.memory_space<vmem>>, vector<32x64xf32>
    %cst = arith.constant dense<0.000000e+00> : vector<8x64xf32>
    %2 = tpu.matmul %0, %1, %cst {dimension_numbers = #tpu.dot_dimension_numbers<[1], [0], [0], [1], [0, 0, 1, 1], [], []>} : vector<8x32xf32>, vector<32x64xf32>, vector<8x64xf32> -> vector<8x64xf32>
    %c0_3 = arith.constant 0 : index
    %c0_4 = arith.constant 0 : index
    %3 = vector.load %arg3[%c0_3, %c0_4] : memref<1x64xf32, #tpu.memory_space<vmem>>, vector<1x64xf32>
    %4 = vector.broadcast %3 : vector<1x64xf32> to vector<8x64xf32>
    %5 = arith.addf %2, %4 : vector<8x64xf32>
    %6 = math.tanh %5 : vector<8x64xf32>
    %c0_5 = arith.constant 0 : index
    %c0_6 = arith.constant 0 : index
    %7 = vector.load %arg4[%c0_5, %c0_6] : memref<64x128xf32, #tpu.memory_space<vmem>>, vector<64x128xf32>
    %cst_7 = arith.constant dense<0.000000e+00> : vector<8x128xf32>
    %8 = tpu.matmul %6, %7, %cst_7 {dimension_numbers = #tpu.dot_dimension_numbers<[1], [0], [0], [1], [0, 0, 1, 1], [], []>} : vector<8x64xf32>, vector<64x128xf32>, vector<8x128xf32> -> vector<8x128xf32>
    %c0_8 = arith.constant 0 : index
    %c0_9 = arith.constant 0 : index
    %9 = vector.load %arg5[%c0_8, %c0_9] : memref<1x128xf32, #tpu.memory_space<vmem>>, vector<1x128xf32>
    %10 = vector.broadcast %9 : vector<1x128xf32> to vector<8x128xf32>
    %11 = arith.addf %8, %10 : vector<8x128xf32>
    %c0_10 = arith.constant 0 : index
    %c0_11 = arith.constant 0 : index
    %12 = vector.load %arg6[%c0_10, %c0_11] : memref<8x128xf32, #tpu.memory_space<vmem>>, vector<8x128xf32>
    tpu.vector_store %arg6[%c0_10, %c0_11], %11 {strides = array<i32>} : memref<8x128xf32, #tpu.memory_space<vmem>>, vector<8x128xf32>,
    return
  }
  func.func @transform_0(%arg0: i32) -> (i32, i32) {
    %c0_i32 = arith.constant 0 : i32
    %c0_i32_0 = arith.constant 0 : i32
    return %arg0, %c0_i32 : i32, i32
  }
  func.func @transform_1(%arg0: i32) -> (i32, i32) {
    %c0_i32 = arith.constant 0 : i32
    %c0_i32_0 = arith.constant 0 : i32
    %c0_i32_1 = arith.constant 0 : i32
    return %c0_i32, %c0_i32_0 : i32, i32
  }
  func.func @transform_2(%arg0: i32) -> (i32, i32) {
    %c0_i32 = arith.constant 0 : i32
    %c0_i32_0 = arith.constant 0 : i32
    %c0_i32_1 = arith.constant 0 : i32
    return %c0_i32, %c0_i32_0 : i32, i32
  }
  func.func @transform_3(%arg0: i32) -> (i32, i32) {
    %c0_i32 = arith.constant 0 : i32
    %c0_i32_0 = arith.constant 0 : i32
    %c0_i32_1 = arith.constant 0 : i32
    return %c0_i32, %c0_i32_0 : i32, i32
  }
  func.func @transform_4(%arg0: i32) -> (i32, i32) {
    %c0_i32 = arith.constant 0 : i32
    %c0_i32_0 = arith.constant 0 : i32
    %c0_i32_1 = arith.constant 0 : i32
    return %c0_i32, %c0_i32_0 : i32, i32
  }
  func.func @transform_5(%arg0: i32) -> (i32, i32) {
    %c0_i32 = arith.constant 0 : i32
    %c0_i32_0 = arith.constant 0 : i32
    return %arg0, %c0_i32 : i32, i32
  }
}

</mosaic_0001>

<llo_original>
// kernel: tpu_custom_call.1
$region0: #{tpu_custom_call.1}
  #allocation0 [shape = 'u32[]', space=smem, size = 0x4, offset = 0x4, fixed_abs, tag = 'smem constant byte address 0x4 - core index']
  #allocation1 [shape = 'u32[144,128]{1,0:T(1,128)}', space=vmem, size = 0x12000, scoped, tag = 'internal scratch']
  %s0 = inlined_call_operand.hbm [shape: f32[8,32], index: 0, kind: input, shape index: {}]
  %s1 = inlined_call_operand.hbm [shape: f32[32,64], index: 1, kind: input, shape index: {}]
  %s2 = inlined_call_operand.vmem [shape: f32[1,64], index: 2, kind: input, shape index: {}]
  %s3 = inlined_call_operand.hbm [shape: f32[64,128], index: 3, kind: input, shape index: {}]
  %s4 = inlined_call_operand.vmem [shape: f32[1,128], index: 4, kind: input, shape index: {}]
  %s5 = inlined_call_operand.hbm [shape: f32[8,128], index: 5, kind: output, shape index: {}]
  %s6 = sld [smem:[#allocation0]]
  $region42: #{tpu_custom_call.1} parent=0
    _
  %s8 = ssub.s32 1, %s6
  %s9 = scalar_select 0, %s8, %s6
  $region1: #{tpu_custom_call.1} parent=0
    #allocation2 [shape = 'u8[4096]{0}', space=vmem, size = 0x1000, scoped, tag = 'input window, operand 0, single buffered']
    #allocation3 [shape = 's32[1]{0}', space=sflag, size = 0x4, scoped, tag = 'scoped memory for tpu_custom_call.1']
    #allocation4 [shape = 's32[1]{0}', space=sflag, size = 0x4, scoped, tag = 'scoped memory for tpu_custom_call.1']
    #allocation5 [shape = 'u8[16384]{0}', space=vmem, size = 0x4000, scoped, tag = 'input window, operand 1, single buffered']
    #allocation6 [shape = 's32[1]{0}', space=sflag, size = 0x4, scoped, tag = 'scoped memory for tpu_custom_call.1']
    #allocation7 [shape = 'u8[32768]{0}', space=vmem, size = 0x8000, scoped, tag = 'input window, operand 3, single buffered']
    #allocation8 [shape = 'u8[4096]{0}', space=vmem, size = 0x1000, scoped, tag = 'output window, operand 0, single buffered']
    %10 = vsyncpa [#allocation3], 0
    %11 = vsyncpa [#allocation6], 0
    %12 = vsyncpa [#allocation4], 0
    // Predicated region
    $region2: #{tpu_custom_call.1} parent=1 // pred_check
      _
    $region3: #{tpu_custom_call.1} parent=1 // pred_check_branch
      %14 = sbr.rel (0) target = $region5
    $region4: #{tpu_custom_call.1} parent=1 // pred_region
      %s16 = ssub.s32 128, 128
      %17 = vsyncadd [#allocation3], %s16
      %s19 = sshll.u32 [#allocation2], 4
      %s20 = int_to_ptr.vmem [resolvable:$true] %s19
      %22 = dma.hbm_to_vmem [thread:$0]  %s0, 128, %s20, [#allocation3]
    $region5: #{tpu_custom_call.1} parent=1 // pred_fallthru
      _
    // Predicated region
    $region6: #{tpu_custom_call.1} parent=1 // pred_check
      _
    $region7: #{tpu_custom_call.1} parent=1 // pred_check_branch
      %24 = sbr.rel (0) target = $region9
    $region8: #{tpu_custom_call.1} parent=1 // pred_region
      %s26 = ssub.s32 512, 512
      %27 = vsyncadd [#allocation6], %s26
      %s28 = sshll.u32 [#allocation5], 4
      %s29 = int_to_ptr.vmem [resolvable:$true] %s28
      %34 = dma.hbm_to_vmem [thread:$0]  %s1, 512, %s29, [#allocation6], 128, 128, 8
    $region9: #{tpu_custom_call.1} parent=1 // pred_fallthru
      _
    // Predicated region
    $region10: #{tpu_custom_call.1} parent=1 // pred_check
      _
    $region11: #{tpu_custom_call.1} parent=1 // pred_check_branch
      %36 = sbr.rel (0) target = $region13
    $region12: #{tpu_custom_call.1} parent=1 // pred_region
      _
    $region13: #{tpu_custom_call.1} parent=1 // pred_fallthru
      _
    // Predicated region
    $region14: #{tpu_custom_call.1} parent=1 // pred_check
      _
    $region15: #{tpu_custom_call.1} parent=1 // pred_check_branch
      %38 = sbr.rel (0) target = $region17
    $region16: #{tpu_custom_call.1} parent=1 // pred_region
      %s40 = ssub.s32 1024, 1024
      %41 = vsyncadd [#allocation6], %s40
      %s42 = sshll.u32 [#allocation7], 4
      %s43 = int_to_ptr.vmem [resolvable:$true] %s42
      %48 = dma.hbm_to_vmem [thread:$0]  %s3, 1024, %s43, [#allocation6], 128, 128, 8
    $region17: #{tpu_custom_call.1} parent=1 // pred_fallthru
      _
    // Predicated region
    $region18: #{tpu_custom_call.1} parent=1 // pred_check
      _
    $region19: #{tpu_custom_call.1} parent=1 // pred_check_branch
      %50 = sbr.rel (0) target = $region21
    $region20: #{tpu_custom_call.1} parent=1 // pred_region
      _
    $region21: #{tpu_custom_call.1} parent=1 // pred_fallthru
      _
    // Predicated region
    $region22: #{tpu_custom_call.1} parent=1 // pred_check
      _
    $region23: #{tpu_custom_call.1} parent=1 // pred_check_branch
      %52 = sbr.rel (0) target = $region25
    $region24: #{tpu_custom_call.1} parent=1 // pred_region
      %53 = dma.done [#allocation3], 128
    $region25: #{tpu_custom_call.1} parent=1 // pred_fallthru
      _
    // Predicated region
    $region26: #{tpu_custom_call.1} parent=1 // pred_check
      _
    $region27: #{tpu_custom_call.1} parent=1 // pred_check_branch
      %55 = sbr.rel (0) target = $region29
    $region28: #{tpu_custom_call.1} parent=1 // pred_region
      %56 = dma.done [#allocation6], 512
    $region29: #{tpu_custom_call.1} parent=1 // pred_fallthru
      _
    // Predicated region
    $region30: #{tpu_custom_call.1} parent=1 // pred_check
      _
    $region31: #{tpu_custom_call.1} parent=1 // pred_check_branch
      %58 = sbr.rel (0) target = $region33
    $region32: #{tpu_custom_call.1} parent=1 // pred_region
      %59 = dma.done [#allocation6], 1024
    $region33: #{tpu_custom_call.1} parent=1 // pred_fallthru
      _
    %v60 = vld [vmem:[#allocation2] sm:$0xff]
    %v61 = vld [vmem:[#allocation5] sm:$0xff]
    %v62 = vld [vmem:[#allocation5 + $0x8] sm:$0xff]
    %v63 = vld [vmem:[#allocation5 + $0x10] sm:$0xff]
    %v64 = vld [vmem:[#allocation5 + $0x18] sm:$0xff]
    %v65 = vld [vmem:[%s2] sm:$0x1]
    %v67 = vlaneseq
    %v68 = vshrl.u32 %v67, 7
    %v69 = vsub.s32 0, %v68
    %v70 = vrot.slane %v65, %v69
    %vm72 = vcmask 261120
    %v74 = vsel %vm72, %v60, 0
    %76 = vmatprep.subr.mxu0 0.0
    %77 = vmatpush1.msra.mxu0 0.0
    %78 = vmatprep.subr.mxu0 0.0
    %79 = vmatpush1.msra.mxu0 0.0
    %80 = vmatprep.subr.mxu0 0.0
    %81 = vmatpush1.msra.mxu0 0.0
    %82 = vmatprep.subr.mxu0 0.0
    %83 = vmatpush1.msra.mxu0 0.0
    %84 = vmatprep.subr.mxu0 0.0
    %85 = vmatpush1.msra.mxu0 0.0
    %86 = vmatprep.subr.mxu0 0.0
    %87 = vmatpush1.msra.mxu0 0.0
    %88 = vmatprep.subr.mxu0 0.0
    %89 = vmatpush1.msra.mxu0 0.0
    %90 = vmatprep.subr.mxu0 0.0
    %91 = vmatpush1.msra.mxu0 0.0
    %92 = vmatprep.subr.mxu0 0.0
    %93 = vmatpush1.msra.mxu0 0.0
    %94 = vmatprep.subr.mxu0 0.0
    %95 = vmatpush1.msra.mxu0 0.0
    %96 = vmatprep.subr.mxu0 0.0
    %97 = vmatpush1.msra.mxu0 0.0
    %98 = vmatprep.subr.mxu0 0.0
    %99 = vmatpush1.msra.mxu0 0.0
    %100 = vmatprep.subr.mxu0 0.0
    %101 = vmatpush1.msra.mxu0 %v64
    %102 = vmatprep.subr.mxu0 0.0
    %103 = vmatpush1.msra.mxu0 %v63
    %104 = vmatprep.subr.mxu0 0.0
    %105 = vmatpush1.msra.mxu0 %v62
    %106 = vmatprep.subr.mxu0 0.0
    %107 = vmatpush1.msra.mxu0 %v61
    %108 = vmatprep.subr.mxu0 0.0
    %109 = vmatpush2.msra.mxu0 0.0
    %110 = vmatprep.subr.mxu0 0.0
    %111 = vmatpush2.msra.mxu0 0.0
    %112 = vmatprep.subr.mxu0 0.0
    %113 = vmatpush2.msra.mxu0 0.0
    %114 = vmatprep.subr.mxu0 0.0
    %115 = vmatpush2.msra.mxu0 0.0
    %116 = vmatprep.subr.mxu0 0.0
    %117 = vmatpush2.msra.mxu0 0.0
    %118 = vmatprep.subr.mxu0 0.0
    %119 = vmatpush2.msra.mxu0 0.0
    %120 = vmatprep.subr.mxu0 0.0
    %121 = vmatpush2.msra.mxu0 0.0
    %122 = vmatprep.subr.mxu0 0.0
    %123 = vmatpush2.msra.mxu0 0.0
    %124 = vmatprep.subr.mxu0 0.0
    %125 = vmatpush2.msra.mxu0 0.0
    %126 = vmatprep.subr.mxu0 0.0
    %127 = vmatpush2.msra.mxu0 0.0
    %128 = vmatprep.subr.mxu0 0.0
    %129 = vmatpush2.msra.mxu0 0.0
    %130 = vmatprep.subr.mxu0 0.0
    %131 = vmatpush2.msra.mxu0 0.0
    %132 = vmatprep.subr.mxu0 0.0
    %133 = vmatpush2.msra.mxu0 0.0
    %134 = vmatprep.subr.mxu0 0.0
    %135 = vmatpush2.msra.mxu0 0.0
    %136 = vmatprep.subr.mxu0 0.0
    %137 = vmatpush2.msra.mxu0 0.0
    %138 = vmatprep.subr.mxu0 0.0
    %139 = vmatpush2.msra.mxu0 0.0
    %140 = vmatprep.mubr.f32.mxu0 0.0
    %141 = vmatmul.mubr.f32.gmra.mxu0 %v74
    %v142 = vpop.f32.mrf.mxu0
    %v143 = vadd.f32 %v70, %v142
    %v144 = vpop.f32.mrf.mxu0
    %145 = vdwg.mxu0
    %v146 = vtanh.pop %v143
    %v147 = vld [vmem:[#allocation7] sm:$0xff]
    %v148 = vld [vmem:[#allocation7 + $0x8] sm:$0xff]
    %v149 = vld [vmem:[#allocation7 + $0x10] sm:$0xff]
    %v150 = vld [vmem:[#allocation7 + $0x18] sm:$0xff]
    %v151 = vld [vmem:[#allocation7 + $0x20] sm:$0xff]
    %v152 = vld [vmem:[#allocation7 + $0x28] sm:$0xff]
    %v153 = vld [vmem:[#allocation7 + $0x30] sm:$0xff]
    %v154 = vld [vmem:[#allocation7 + $0x38] sm:$0xff]
    %v155 = vld [vmem:[%s4] sm:$0x1]
    %v157 = vlaneseq
    %v158 = vshrl.u32 %v157, 7
    %v159 = vsub.s32 0, %v158
    %v160 = vrot.slane %v155, %v159
    %vm162 = vcmask 523264
    %v164 = vsel %vm162, %v146, 0
    %166 = vmatprep.subr.mxu0 0.0
    %167 = vmatpush1.msra.mxu0 0.0
    %168 = vmatprep.subr.mxu0 0.0
    %169 = vmatpush1.msra.mxu0 0.0
    %170 = vmatprep.subr.mxu0 0.0
    %171 = vmatpush1.msra.mxu0 0.0
    %172 = vmatprep.subr.mxu0 0.0
    %173 = vmatpush1.msra.mxu0 0.0
    %174 = vmatprep.subr.mxu0 0.0
    %175 = vmatpush1.msra.mxu0 0.0
    %176 = vmatprep.subr.mxu0 0.0
    %177 = vmatpush1.msra.mxu0 0.0
    %178 = vmatprep.subr.mxu0 0.0
    %179 = vmatpush1.msra.mxu0 0.0
    %180 = vmatprep.subr.mxu0 0.0
    %181 = vmatpush1.msra.mxu0 0.0
    %182 = vmatprep.subr.mxu0 0.0
    %183 = vmatpush1.msra.mxu0 %v154
    %184 = vmatprep.subr.mxu0 0.0
    %185 = vmatpush1.msra.mxu0 %v153
    %186 = vmatprep.subr.mxu0 0.0
    %187 = vmatpush1.msra.mxu0 %v152
    %188 = vmatprep.subr.mxu0 0.0
    %189 = vmatpush1.msra.mxu0 %v151
    %190 = vmatprep.subr.mxu0 0.0
    %191 = vmatpush1.msra.mxu0 %v150
    %192 = vmatprep.subr.mxu0 0.0
    %193 = vmatpush1.msra.mxu0 %v149
    %194 = vmatprep.subr.mxu0 0.0
    %195 = vmatpush1.msra.mxu0 %v148
    %196 = vmatprep.subr.mxu0 0.0
    %197 = vmatpush1.msra.mxu0 %v147
    %198 = vmatprep.subr.mxu0 0.0
    %199 = vmatpush2.msra.mxu0 0.0
    %200 = vmatprep.subr.mxu0 0.0
    %201 = vmatpush2.msra.mxu0 0.0
    %202 = vmatprep.subr.mxu0 0.0
    %203 = vmatpush2.msra.mxu0 0.0
    %204 = vmatprep.subr.mxu0 0.0
    %205 = vmatpush2.msra.mxu0 0.0
    %206 = vmatprep.subr.mxu0 0.0
    %207 = vmatpush2.msra.mxu0 0.0
    %208 = vmatprep.subr.mxu0 0.0
    %209 = vmatpush2.msra.mxu0 0.0
    %210 = vmatprep.subr.mxu0 0.0
    %211 = vmatpush2.msra.mxu0 0.0
    %212 = vmatprep.subr.mxu0 0.0
    %213 = vmatpush2.msra.mxu0 0.0
    %214 = vmatprep.subr.mxu0 0.0
    %215 = vmatpush2.msra.mxu0 0.0
    %216 = vmatprep.subr.mxu0 0.0
    %217 = vmatpush2.msra.mxu0 0.0
    %218 = vmatprep.subr.mxu0 0.0
    %219 = vmatpush2.msra.mxu0 0.0
    %220 = vmatprep.subr.mxu0 0.0
    %221 = vmatpush2.msra.mxu0 0.0
    %222 = vmatprep.subr.mxu0 0.0
    %223 = vmatpush2.msra.mxu0 0.0
    %224 = vmatprep.subr.mxu0 0.0
    %225 = vmatpush2.msra.mxu0 0.0
    %226 = vmatprep.subr.mxu0 0.0
    %227 = vmatpush2.msra.mxu0 0.0
    %228 = vmatprep.subr.mxu0 0.0
    %229 = vmatpush2.msra.mxu0 0.0
    %230 = vmatprep.mubr.f32.mxu0 0.0
    %231 = vmatmul.mubr.f32.gmra.mxu0 %v164
    %v232 = vpop.f32.mrf.mxu0
    %v233 = vadd.f32 %v160, %v232
    %v234 = vpop.f32.mrf.mxu0
    %235 = vdwg.mxu0
    %236 = vst [vmem:[#allocation8] sm:$0xff] %v233
    // Predicated region
    $region34: #{tpu_custom_call.1} parent=1 // pred_check
      _
    $region35: #{tpu_custom_call.1} parent=1 // pred_check_branch
      %238 = sbr.rel (0) target = $region37
    $region36: #{tpu_custom_call.1} parent=1 // pred_region
      %s240 = ssub.s32 128, 128
      %241 = vsyncadd [#allocation4], %s240
      %s243 = sshll.u32 [#allocation8], 4
      %s244 = int_to_ptr.vmem [resolvable:$true] %s243
      %246 = dma.vmem_to_hbm [thread:$0]  %s244, 128, %s5, [#allocation4]
    $region37: #{tpu_custom_call.1} parent=1 // pred_fallthru
      _
    // Predicated region
    $region38: #{tpu_custom_call.1} parent=1 // pred_check
      _
    $region39: #{tpu_custom_call.1} parent=1 // pred_check_branch
      %248 = sbr.rel (0) target = $region41
    $region40: #{tpu_custom_call.1} parent=1 // pred_region
      %249 = dma.done [#allocation4], 128
    $region41: #{tpu_custom_call.1} parent=1 // pred_fallthru
      _
    %250 = vsyncpa [#allocation3], 1
    %251 = vsyncpa [#allocation6], 1
    %252 = vsyncpa [#allocation4], 1

</llo_original>
